<compile_context>
chip_gen: v5e
topology: v5e:2x2
jax: 0.10.0
libtpu: 0.0.40
codegen_flags: <defaults>
</compile_context>

<pallas_src>
import functools

import jax
import jax.numpy as jnp
from jax import lax
from jax.experimental import pallas as pl
from jax.experimental.pallas import tpu as pltpu

_LANE = 128
_SUBLANE = 8
_MIB = 1024 * 1024
_MIN_PALLAS_BYTES = 512 * 1024   # below this, let XLA fuse it
_GRID2_BYTES = 2 * _MIB          # above this, force >= 2 grid steps (2 TCs on v7x)


def _round_down(x, m):
    return max((x // m) * m, m)


def _tpu_vmem_bytes():
    """Physical VMEM per core; conservative (v7x-sized) fallback."""
    try:
        return int(pltpu.get_tpu_info().vmem_capacity_bytes)
    except Exception:
        return 64 * _MIB


def _pick_block_bytes(vmem_cap):
    # ~4 MiB blocks on v7x (64 MiB/TC), ~8 MiB on v5e/v6e (128 MiB).
    return max(2 * _MIB, min(8 * _MIB, vmem_cap // 16))


def _compiler_params(block_bytes, itemsize, vmem_cap, semantics):
    # Double-buffered in + out + one f32 in-kernel temp per block + slack,
    # capped well under physical VMEM.
    f32_temp = block_bytes * 4 // max(itemsize, 1)
    limit = 4 * block_bytes + 2 * f32_temp + 4 * _MIB
    limit = int(min(limit, vmem_cap * 3 // 4))
    return pltpu.CompilerParams(dimension_semantics=semantics,
                                vmem_limit_bytes=limit)


# ---------------------------------------------------------------------------
# Kernels
# ---------------------------------------------------------------------------

def _wn_rows_kernel(g_ref, v_ref, o_ref, *, eps):
    """Single-pass path: block is (TILE_C0, R); reduce over the lane axis."""
    v32 = v_ref[...].astype(jnp.float32)                 # (TILE_C0, R) temp
    ssq = jnp.sum(v32 * v32, axis=1, keepdims=True)      # (TILE_C0, 1)
    g = g_ref[...].astype(jnp.float32)                   # (TILE_C0, 1)
    # clamp_min(sqrt(ssq), eps) == sqrt(max(ssq, eps^2)); rsqrt -> EUP slot.
    scale = g * lax.rsqrt(jnp.maximum(ssq, eps * eps))
    # Re-read v in native dtype: no second f32 copy of the block stays live,
    # and the final multiply runs at native width (bf16 VPU on v6e/v7x).
    o_ref[...] = v_ref[...] * scale.astype(o_ref.dtype)


def _wn_reduce_kernel(g_ref, v_ref, scale_ref, ssq_ref, *, eps, r_total, tile_r):
    """Wide-R pass 1: accumulate per-row ssq over R chunks, emit f32 scale."""
    k = pl.program_id(1)

    @pl.when(k == 0)
    def _():
        ssq_ref[...] = jnp.zeros_like(ssq_ref)

    v = v_ref[...].astype(jnp.float32)                   # (TILE_C0, TILE_R)
    if r_total % tile_r != 0:
        # Mask the padded tail of the last (ragged) R chunk.
        col = lax.broadcasted_iota(jnp.int32, v.shape, 1) + k * tile_r
        v = jnp.where(col < r_total, v, 0.0)
    ssq_ref[...] += jnp.sum(v * v, axis=1, keepdims=True)

    @pl.when(k == pl.num_programs(1) - 1)
    def _():
        g = g_ref[...].astype(jnp.float32)
        scale_ref[...] = g * lax.rsqrt(jnp.maximum(ssq_ref[...], eps * eps))


def _wn_scale_kernel(s_ref, v_ref, o_ref):
    """Wide-R pass 2: stream v and multiply by the per-row scale."""
    o_ref[...] = v_ref[...] * s_ref[...].astype(o_ref.dtype)


# ---------------------------------------------------------------------------
# Wrapper
# ---------------------------------------------------------------------------

def weight_norm_forward(weight_g, weight_v, eps=1e-8, dim=0,
                        max_block_bytes=None,
                        min_pallas_bytes=_MIN_PALLAS_BYTES):
    """Pallas implementation of WeightNormFunction.forward (dim=0 path)."""
    dim = weight_v.ndim + dim if dim < 0 else dim
    assert dim == 0, "this kernel implements the dim=0 (default) case"
    # TODO(synk): dim != 0 path (norm over all dims except the last) not implemented.

    c0 = weight_v.shape[0]
    r = 1
    for s in weight_v.shape[1:]:
        r *= s
    itemsize = jnp.dtype(weight_v.dtype).itemsize
    total_bytes = c0 * r * itemsize
    out_dtype = weight_v.dtype
    eps = float(eps)  # baked literal, not a captured array

    v2d = weight_v.reshape(c0, r)
    g2d = weight_g.reshape(c0, 1)

    # Small weights: pallas launch + pipeline prologue dominates; let XLA fuse.
    if total_bytes < min_pallas_bytes:
        v32 = v2d.astype(jnp.float32)
        g32 = g2d.astype(jnp.float32)
        ssq = jnp.sum(v32 * v32, axis=1, keepdims=True)
        out2d = (g32 * lax.rsqrt(jnp.maximum(ssq, eps * eps)) * v32).astype(out_dtype)
        return out2d.reshape(weight_v.shape)

    vmem_cap = _tpu_vmem_bytes()
    if max_block_bytes is None:
        max_block_bytes = _pick_block_bytes(vmem_cap)

    n_elems = c0 * r
    row_bytes = r * itemsize

    if _SUBLANE * row_bytes <= max_block_bytes:
        # ---- Single-pass path: tile C0, full flattened R on the lane axis ----
        tile_c0 = max_block_bytes // row_bytes
        if tile_c0 >= c0:
            if total_bytes > _GRID2_BYTES and c0 >= 2 * _SUBLANE:
                # Force >= 2 grid steps so both v7x TensorCores get work.
                tile_c0 = _round_down(c0 // 2, _SUBLANE)
            else:
                tile_c0 = c0
        else:
            tile_c0 = _round_down(tile_c0, _SUBLANE)
        grid = (pl.cdiv(c0, tile_c0),)
        cost = pl.CostEstimate(flops=3 * n_elems, transcendentals=c0,
                               bytes_accessed=2 * total_bytes + c0 * itemsize)
        out2d = pl.pallas_call(
            functools.partial(_wn_rows_kernel, eps=eps),
            out_shape=jax.ShapeDtypeStruct((c0, r), out_dtype),
            grid=grid,
            in_specs=[
                pl.BlockSpec((tile_c0, 1), lambda i: (i, 0)),
                pl.BlockSpec((tile_c0, r), lambda i: (i, 0)),
            ],
            out_specs=pl.BlockSpec((tile_c0, r), lambda i: (i, 0)),
            compiler_params=_compiler_params(tile_c0 * row_bytes, itemsize,
                                             vmem_cap, ("parallel",)),
            cost_estimate=cost,
        )(g2d, v2d)
    else:
        # ---- Wide-R two-pass path: even 8 rows blow the block budget ----
        tile_c0 = min(c0, _LANE)
        if tile_c0 < c0:
            tile_c0 = _round_down(tile_c0, _SUBLANE)
        tile_r = _round_down(max_block_bytes // (tile_c0 * itemsize), _LANE)
        grid = (pl.cdiv(c0, tile_c0), pl.cdiv(r, tile_r))
        blk_bytes = tile_c0 * tile_r * itemsize

        # Pass 1: per-row sum-of-squares -> f32 scale = g * rsqrt(max(ssq, eps^2)).
        cost1 = pl.CostEstimate(flops=2 * n_elems, transcendentals=c0,
                                bytes_accessed=total_bytes + c0 * (itemsize + 4))
        scale = pl.pallas_call(
            functools.partial(_wn_reduce_kernel, eps=eps, r_total=r, tile_r=tile_r),
            out_shape=jax.ShapeDtypeStruct((c0, 1), jnp.float32),
            grid=grid,
            in_specs=[
                pl.BlockSpec((tile_c0, 1), lambda i, k: (i, 0)),
                pl.BlockSpec((tile_c0, tile_r), lambda i, k: (i, k)),
            ],
            out_specs=pl.BlockSpec((tile_c0, 1), lambda i, k: (i, 0)),
            scratch_shapes=[pltpu.VMEM((tile_c0, 1), jnp.float32)],
            compiler_params=_compiler_params(blk_bytes, itemsize, vmem_cap,
                                             ("parallel", "arbitrary")),
            cost_estimate=cost1,
        )(g2d, v2d)

        # Pass 2: stream v and apply the per-row scale.
        cost2 = pl.CostEstimate(flops=n_elems, transcendentals=0,
                                bytes_accessed=2 * total_bytes + c0 * 4)
        out2d = pl.pallas_call(
            _wn_scale_kernel,
            out_shape=jax.ShapeDtypeStruct((c0, r), out_dtype),
            grid=grid,
            in_specs=[
                pl.BlockSpec((tile_c0, 1), lambda i, k: (i, 0)),
                pl.BlockSpec((tile_c0, tile_r), lambda i, k: (i, k)),
            ],
            out_specs=pl.BlockSpec((tile_c0, tile_r), lambda i, k: (i, k)),
            compiler_params=_compiler_params(blk_bytes, itemsize, vmem_cap,
                                             ("parallel", "parallel")),
            cost_estimate=cost2,
        )(scale, v2d)

    return out2d.reshape(weight_v.shape)


def _reference(weight_g, weight_v, eps=1e-8):
    """Pure-JAX reference for g / clamp_min(norm_except_dim(v,2,0), eps) * v."""
    c0 = weight_v.shape[0]
    v32 = weight_v.reshape(c0, -1).astype(jnp.float32)
    g32 = weight_g.reshape(c0, 1).astype(jnp.float32)
    norm = jnp.sqrt(jnp.sum(v32 * v32, axis=1, keepdims=True))
    norm = jnp.maximum(norm, eps)
    out = (g32 / norm) * v32
    return out.reshape(weight_v.shape).astype(weight_v.dtype)


if __name__ == "__main__":
    key = jax.random.PRNGKey(0)
    k1g, k1v, k2g, k2v, k3g, k3v, k4g, k4v = jax.random.split(key, 8)

    # Case 1: conv-style f32 weight, tiny budget -> multi-step single-pass grid
    #         with a ragged last row-tile.
    v1 = jax.random.normal(k1v, (512, 4, 3, 3), dtype=jnp.float32)
    g1 = jax.random.normal(k1g, (512, 1, 1, 1), dtype=jnp.float32)
    o1 = weight_norm_forward(g1, v1, eps=1e-8, dim=0,
                             max_block_bytes=32 * 1024, min_pallas_bytes=0)
    o1 = jax.block_until_ready(o1)
    r1 = _reference(g1, v1, eps=1e-8)
    assert o1.shape == v1.shape and o1.dtype == v1.dtype
    assert jnp.allclose(o1, r1, atol=1e-4, rtol=1e-4)

    # Case 2: bf16 conv weight, default gen-aware block sizing -> single block.
    v2 = jax.random.normal(k2v, (256, 64, 3, 3), dtype=jnp.bfloat16)
    g2 = jax.random.normal(k2g, (256, 1, 1, 1), dtype=jnp.bfloat16)
    o2 = weight_norm_forward(g2, v2, eps=1e-8, dim=0, min_pallas_bytes=0)
    o2 = jax.block_until_ready(o2)
    r2 = _reference(g2, v2, eps=1e-8)
    assert o2.shape == v2.shape and o2.dtype == v2.dtype
    assert jnp.allclose(o2.astype(jnp.float32), r2.astype(jnp.float32),
                        atol=2e-2, rtol=2e-2)

    # Case 3: 4 MiB f32 weight with all-default params -> forced grid >= 2
    #         (both TensorCores on v7x via "parallel" semantics).
    v3 = jax.random.normal(k3v, (1024, 16, 8, 8), dtype=jnp.float32)
    g3 = jax.random.normal(k3g, (1024, 1, 1, 1), dtype=jnp.float32)
    o3 = weight_norm_forward(g3, v3, eps=1e-8, dim=0)
    o3 = jax.block_until_ready(o3)
    r3 = _reference(g3, v3, eps=1e-8)
    assert o3.shape == v3.shape
    assert jnp.allclose(o3, r3, atol=1e-4, rtol=1e-4)

    # Case 4: wide flattened rows + tiny budget -> two-pass (reduce, then scale)
    #         path with a ragged R chunk (exercises the in-kernel mask).
    v4 = jax.random.normal(k4v, (64, 4000), dtype=jnp.float32)
    g4 = jax.random.normal(k4g, (64, 1), dtype=jnp.float32)
    o4 = weight_norm_forward(g4, v4, eps=1e-8, dim=0,
                             max_block_bytes=64 * 1024, min_pallas_bytes=0)
    o4 = jax.block_until_ready(o4)
    r4 = _reference(g4, v4, eps=1e-8)
    assert o4.shape == v4.shape and o4.dtype == v4.dtype
    assert jnp.allclose(o4, r4, atol=1e-4, rtol=1e-4)

    print("KERNEL_OK")
</pallas_src>

<mosaic_0001>
module attributes {stable_mosaic.version = 11 : i64} {
  func.func @_wn_rows_kernel(%arg0: i32, %arg1: memref<224x1xf32, #tpu.memory_space<vmem>>, %arg2: memref<224x36xf32, #tpu.memory_space<vmem>>, %arg3: memref<224x36xf32, #tpu.memory_space<vmem>>) attributes {dimension_semantics = [#tpu.dimension_semantics<parallel>], iteration_bounds = array<i64: 3>, scalar_prefetch = 0 : i64, scratch_operands = 0 : i64, tpu.core_type = #tpu.core_type<tc>, window_params = [{transform_indices = @transform_0, window_bounds = array<i64: 224, 1>}, {transform_indices = @transform_1, window_bounds = array<i64: 224, 36>}, {transform_indices = @transform_2, window_bounds = array<i64: 224, 36>}]} {
    %c0 = arith.constant 0 : index
    %c0_0 = arith.constant 0 : index
    %0 = vector.load %arg2[%c0, %c0_0] : memref<224x36xf32, #tpu.memory_space<vmem>>, vector<224x36xf32>
    %1 = arith.mulf %0, %0 : vector<224x36xf32>
    %cst = arith.constant dense<0.000000e+00> : vector<224xf32>
    %2 = vector.multi_reduction <add>, %1, %cst [1] : vector<224x36xf32> to vector<224xf32>
    %3 = vector.shape_cast %2 : vector<224xf32> to vector<224x1xf32>
    %c0_1 = arith.constant 0 : index
    %c0_2 = arith.constant 0 : index
    %4 = vector.load %arg1[%c0_1, %c0_2] : memref<224x1xf32, #tpu.memory_space<vmem>>, vector<224x1xf32>
    %cst_3 = arith.constant 1.000000e-16 : f32
    %5 = vector.broadcast %cst_3 : f32 to vector<224x1xf32>
    %6 = arith.maximumf %3, %5 : vector<224x1xf32>
    %7 = math.rsqrt %6 : vector<224x1xf32>
    %8 = arith.mulf %4, %7 : vector<224x1xf32>
    %c0_4 = arith.constant 0 : index
    %c0_5 = arith.constant 0 : index
    %9 = vector.load %arg2[%c0_4, %c0_5] : memref<224x36xf32, #tpu.memory_space<vmem>>, vector<224x36xf32>
    %10 = vector.broadcast %8 : vector<224x1xf32> to vector<224x36xf32>
    %11 = arith.mulf %9, %10 : vector<224x36xf32>
    %c0_6 = arith.constant 0 : index
    %c0_7 = arith.constant 0 : index
    %12 = vector.load %arg3[%c0_6, %c0_7] : memref<224x36xf32, #tpu.memory_space<vmem>>, vector<224x36xf32>
    tpu.vector_store %arg3[%c0_6, %c0_7], %11 {strides = array<i32>} : memref<224x36xf32, #tpu.memory_space<vmem>>, vector<224x36xf32>,
    return
  }
  func.func @transform_0(%arg0: i32) -> (i32, i32) {
    %c0_i32 = arith.constant 0 : i32
    %c0_i32_0 = arith.constant 0 : i32
    return %arg0, %c0_i32 : i32, i32
  }
  func.func @transform_1(%arg0: i32) -> (i32, i32) {
    %c0_i32 = arith.constant 0 : i32
    %c0_i32_0 = arith.constant 0 : i32
    return %arg0, %c0_i32 : i32, i32
  }
  func.func @transform_2(%arg0: i32) -> (i32, i32) {
    %c0_i32 = arith.constant 0 : i32
    %c0_i32_0 = arith.constant 0 : i32
    return %arg0, %c0_i32 : i32, i32
  }
}

</mosaic_0001>

<llo_original>
// kernel: tpu_custom_call.1
$region0: #{tpu_custom_call.1}
  #allocation0 [shape = 'u32[]', space=smem, size = 0x4, offset = 0x4, fixed_abs, tag = 'smem constant byte address 0x4 - core index']
  #allocation1 [shape = 'u32[72,128]{1,0:T(1,128)}', space=vmem, size = 0x9000, scoped, tag = 'internal scratch']
  %s0 = inlined_call_operand.vmem [shape: f32[512,1], index: 0, kind: input, shape index: {}]
  %s1 = inlined_call_operand.vmem [shape: f32[512,36], index: 1, kind: input, shape index: {}]
  %s2 = inlined_call_operand.vmem [shape: f32[512,36], index: 2, kind: output, shape index: {}]
  %s3 = sld [smem:[#allocation0]]
  $region89: #{tpu_custom_call.1} parent=0
    _
  %s5 = ssub.s32 1, %s3
  %s6 = scalar_select 0, %s5, %s3
  $region1: #{tpu_custom_call.1} parent=0
    #allocation2 [shape = 'u8[229376]{0}', space=vmem, size = 0x38000, scoped, tag = 'output window, operand 0']
    loop: start=0, step=1, limit=5
    $region2: #{tpu_custom_call.1} parent=1 // loop_pre_header
      _
    $region3: #{tpu_custom_call.1} parent=1 // loop_header
      %s8 = sphi 0, %s12
      %p9 = scmp.ge.s32.totalorder %s8, 5
      %s18 = sphi 0, %s20
      %s21 = sphi 0, %s18
      %s22 = sphi 0, %s21
      %s38 = sphi 0, %s22
      %s44 = sphi 0, %s46
      %s47 = sphi 0, %s44
      %s48 = sphi 0, %s47
      %s64 = sphi 0, %s48
      %s70 = sphi 0, %s72
      %s73 = sphi 0, %s70
      %s74 = sphi 0, %s73
      %s90 = sphi 0, %s74
    $region4: #{tpu_custom_call.1} parent=1 // loop_header_branch
      %11 = sbr.rel (%p9) target = $region8
    $region5: #{tpu_custom_call.1} parent=1 // loop_body
      %s13 = ssub.s32 %s8, 1
      %s14 = ssub.s32 %s8, 2
      %s15 = sadd.s32 %s8, 1
      %s16 = ssub.s32 %s8, %s15
      %p17 = scmp.eq.s32.totalorder %s16, 0
      %s19 = sadd.s32 %s18, 1
      %s20 = scalar_select %p17, %s18, %s19
      %p23 = pneg %p17
      %p24 = scmp.eq.s32.totalorder %s8, 2
      %p25 = por %p23, %p24
      %p26 = scmp.ne.s32.totalorder %s18, %s21
      %p27 = scmp.eq.s32.totalorder %s8, 0
      %p28 = por %p26, %p27
      %p29 = scmp.ne.s32.totalorder %s18, %s21
      %p30 = scmp.eq.s32.totalorder %s13, 2
      %p31 = por %p29, %p30
      %p32 = scmp.ne.s32.totalorder %s21, %s22
      %p33 = scmp.eq.s32.totalorder %s13, 0
      %p34 = por %p32, %p33
      %p35 = scmp.ne.s32.totalorder %s21, %s22
      %p36 = scmp.eq.s32.totalorder %s14, 2
      %p37 = por %p35, %p36
      %p39 = scmp.ne.s32.totalorder %s22, %s38
      %p40 = scmp.eq.s32.totalorder %s14, 0
      %p41 = por %p39, %p40
      %s42 = ssub.s32 %s8, %s15
      %p43 = scmp.eq.s32.totalorder %s42, 0
      %s45 = sadd.s32 %s44, 1
      %s46 = scalar_select %p43, %s44, %s45
      %p49 = pneg %p43
      %p50 = scmp.eq.s32.totalorder %s8, 2
      %p51 = por %p49, %p50
      %p52 = scmp.ne.s32.totalorder %s44, %s47
      %p53 = scmp.eq.s32.totalorder %s8, 0
      %p54 = por %p52, %p53
      %p55 = scmp.ne.s32.totalorder %s44, %s47
      %p56 = scmp.eq.s32.totalorder %s13, 2
      %p57 = por %p55, %p56
      %p58 = scmp.ne.s32.totalorder %s47, %s48
      %p59 = scmp.eq.s32.totalorder %s13, 0
      %p60 = por %p58, %p59
      %p61 = scmp.ne.s32.totalorder %s47, %s48
      %p62 = scmp.eq.s32.totalorder %s14, 2
      %p63 = por %p61, %p62
      %p65 = scmp.ne.s32.totalorder %s48, %s64
      %p66 = scmp.eq.s32.totalorder %s14, 0
      %p67 = por %p65, %p66
      %s68 = ssub.s32 %s8, %s15
      %p69 = scmp.eq.s32.totalorder %s68, 0
      %s71 = sadd.s32 %s70, 1
      %s72 = scalar_select %p69, %s70, %s71
      %p75 = pneg %p69
      %p76 = scmp.eq.s32.totalorder %s8, 2
      %p77 = por %p75, %p76
      %p78 = scmp.ne.s32.totalorder %s70, %s73
      %p79 = scmp.eq.s32.totalorder %s8, 0
      %p80 = por %p78, %p79
      %p81 = scmp.ne.s32.totalorder %s70, %s73
      %p82 = scmp.eq.s32.totalorder %s13, 2
      %p83 = por %p81, %p82
      %p84 = scmp.ne.s32.totalorder %s73, %s74
      %p85 = scmp.eq.s32.totalorder %s13, 0
      %p86 = por %p84, %p85
      %p87 = scmp.ne.s32.totalorder %s73, %s74
      %p88 = scmp.eq.s32.totalorder %s14, 2
      %p89 = por %p87, %p88
      %p91 = scmp.ne.s32.totalorder %s74, %s90
      %p92 = scmp.eq.s32.totalorder %s14, 0
      %p93 = por %p91, %p92
      %p94 = scmp.le.s32.totalorder 1, %s8
      %p95 = scmp.lt.s32.totalorder %s8, 4
      %p96 = pnand %p94, %p95
      %p97 = pneg %p96
      // Predicated region
      $region9: #{tpu_custom_call.1} parent=5 // pred_check
        _
      $region10: #{tpu_custom_call.1} parent=5 // pred_check_branch
        %99 = sbr.rel (%p96) target = $region12
      $region11: #{tpu_custom_call.1} parent=5 // pred_region
        %s100 = ssub.s32 %s8, 1
      $region12: #{tpu_custom_call.1} parent=5 // pred_fallthru
        _
      %p101 = scmp.lt.s32.totalorder %s8, 3
      // Predicated region
      $region13: #{tpu_custom_call.1} parent=5 // pred_check
        %p102 = pneg %p101
      $region14: #{tpu_custom_call.1} parent=5 // pred_check_branch
        %104 = sbr.rel (%p102) target = $region16
      $region15: #{tpu_custom_call.1} parent=5 // pred_region
        // Predicated region
        $region17: #{tpu_custom_call.1} parent=15 // pred_check
          %p105 = pneg %p28
        $region18: #{tpu_custom_call.1} parent=15 // pred_check_branch
          %107 = sbr.rel (%p105) target = $region20
        $region19: #{tpu_custom_call.1} parent=15 // pred_region
          %s108 = smul.u32 28, %s8
          %s109 = ssub.s32 64, %s108
          %p110 = scmp.lt.s32.totalorder %s109, 28
          %s111 = scalar_select %p110, %s109, 28
          %s112 = smul.u32 8, %s111
          %p113 = scmp.lt.s32.totalorder %s108, 63
          %s114 = scalar_select %p113, %s108, 63
          %s115 = smul.addr %s114, 8
          %s116 = scalar_lea.vmem %s0, %s115
          %s117 = smul.u32 28, %s8
          %s118 = ssub.s32 64, %s117
          %p119 = scmp.lt.s32.totalorder %s118, 28
          %s120 = scalar_select %p119, %s118, 28
          %s121 = smul.u32 8, %s120
        $region20: #{tpu_custom_call.1} parent=15 // pred_fallthru
          _
        // Predicated region
        $region21: #{tpu_custom_call.1} parent=15 // pred_check
          %p122 = pneg %p54
        $region22: #{tpu_custom_call.1} parent=15 // pred_check_branch
          %124 = sbr.rel (%p122) target = $region24
        $region23: #{tpu_custom_call.1} parent=15 // pred_region
          %s125 = smul.u32 28, %s8
          %s126 = ssub.s32 64, %s125
          %p127 = scmp.lt.s32.totalorder %s126, 28
          %s128 = scalar_select %p127, %s126, 28
          %s129 = smul.u32 8, %s128
          %p130 = scmp.lt.s32.totalorder %s125, 63
          %s131 = scalar_select %p130, %s125, 63
          %s132 = smul.addr %s131, 8
          %s133 = scalar_lea.vmem %s1, %s132
          %s134 = smul.u32 28, %s8
          %s135 = ssub.s32 64, %s134
          %p136 = scmp.lt.s32.totalorder %s135, 28
          %s137 = scalar_select %p136, %s135, 28
          %s138 = smul.u32 8, %s137
        $region24: #{tpu_custom_call.1} parent=15 // pred_fallthru
          _
      $region16: #{tpu_custom_call.1} parent=5 // pred_fallthru
        _
      %p139 = scmp.le.s32.totalorder 1, %s8
      %p140 = scmp.lt.s32.totalorder %s8, 4
      %p141 = pnand %p139, %p140
      %p142 = pneg %p141
      // Predicated region
      $region25: #{tpu_custom_call.1} parent=5 // pred_check
        _
      $region26: #{tpu_custom_call.1} parent=5 // pred_check_branch
        %144 = sbr.rel (%p141) target = $region28
      $region27: #{tpu_custom_call.1} parent=5 // pred_region
        %s145 = ssub.s32 %s8, 1
        %s146 = smul.u32 28, %s13
        %s147 = ssub.s32 64, %s146
        %p148 = scmp.lt.s32.totalorder %s147, 28
        %s149 = scalar_select %p148, %s147, 28
        %s150 = smul.u32 8, %s149
        %p151 = scmp.lt.s32.totalorder %s146, 63
        %s152 = scalar_select %p151, %s146, 63
        %s153 = smul.addr %s152, 8
        %s154 = scalar_lea.vmem %s0, %s153
        %p155 = pneg %p34
        %p156 = pneg %p31
        %s157 = smul.u32 28, %s13
        %s158 = ssub.s32 64, %s157
        %p159 = scmp.lt.s32.totalorder %s158, 28
        %s160 = scalar_select %p159, %s158, 28
        %s161 = smul.u32 8, %s160
        %p162 = scmp.lt.s32.totalorder %s157, 63
        %s163 = scalar_select %p162, %s157, 63
        %s164 = smul.addr %s163, 8
        %s165 = scalar_lea.vmem %s1, %s164
        %p166 = pneg %p60
        %p167 = pneg %p57
        %p168 = pneg %p86
        %p169 = pneg %p83
        %s170 = sand.u32 %s73, 1
        %s171 = sand.u32 %s73, 1
        %s172 = smul.addr %s171, 224
        %s173 = scalar_lea.vmem [#allocation2], %s172
        %s174 = smul.u32 28, %s13
        %s175 = ssub.s32 64, %s174
        %p176 = scmp.lt.s32.totalorder %s175, 28
        %s177 = scalar_select %p176, %s175, 28
        %s178 = smul.u32 8, %s177
        %p179 = scmp.lt.s32.totalorder %s174, 63
        %s180 = scalar_select %p179, %s174, 63
        %s181 = smul.addr %s180, 8
        %s182 = scalar_lea.vmem %s0, %s181
        %s183 = smul.u32 28, %s13
        %s184 = ssub.s32 64, %s183
        %p185 = scmp.lt.s32.totalorder %s184, 28
        %s186 = scalar_select %p185, %s184, 28
        %s187 = smul.u32 8, %s186
        %s188 = smul.u32 28, %s13
        %s189 = ssub.s32 64, %s188
        %p190 = scmp.lt.s32.totalorder %s189, 28
        %s191 = scalar_select %p190, %s189, 28
        %s192 = smul.u32 8, %s191
        %p193 = scmp.lt.s32.totalorder %s188, 63
        %s194 = scalar_select %p193, %s188, 63
        %s195 = smul.addr %s194, 8
        %s196 = scalar_lea.vmem %s1, %s195
        %s197 = smul.u32 28, %s13
        %s198 = ssub.s32 64, %s197
        %p199 = scmp.lt.s32.totalorder %s198, 28
        %s200 = scalar_select %p199, %s198, 28
        %s201 = smul.u32 8, %s200
        %s202 = smul.u32 28, %s13
        %s203 = ssub.s32 64, %s202
        %p204 = scmp.lt.s32.totalorder %s203, 28
        %s205 = scalar_select %p204, %s203, 28
        %s206 = smul.u32 8, %s205
        %v207 = vld [vmem:[%s196] sm:$0xff]
        %v208 = vld [vmem:[%s196 + $0x8] sm:$0xff]
        %v209 = vld [vmem:[%s196 + $0x10] sm:$0xff]
        %v210 = vld [vmem:[%s196 + $0x18] sm:$0xff]
        %v211 = vld [vmem:[%s196 + $0x20] sm:$0xff]
        %v212 = vld [vmem:[%s196 + $0x28] sm:$0xff]
        %v213 = vld [vmem:[%s196 + $0x30] sm:$0xff]
        %v214 = vld [vmem:[%s196 + $0x38] sm:$0xff]
        %v215 = vld [vmem:[%s196 + $0x40] sm:$0xff]
        %v216 = vld [vmem:[%s196 + $0x48] sm:$0xff]
        %v217 = vld [vmem:[%s196 + $0x50] sm:$0xff]
        %v218 = vld [vmem:[%s196 + $0x58] sm:$0xff]
        %v219 = vld [vmem:[%s196 + $0x60] sm:$0xff]
        %v220 = vld [vmem:[%s196 + $0x68] sm:$0xff]
        %v221 = vld [vmem:[%s196 + $0x70] sm:$0xff]
        %v222 = vld [vmem:[%s196 + $0x78] sm:$0xff]
        %v223 = vld [vmem:[%s196 + $0x80] sm:$0xff]
        %v224 = vld [vmem:[%s196 + $0x88] sm:$0xff]
        %v225 = vld [vmem:[%s196 + $0x90] sm:$0xff]
        %v226 = vld [vmem:[%s196 + $0x98] sm:$0xff]
        %v227 = vld [vmem:[%s196 + $0xa0] sm:$0xff]
        %v228 = vld [vmem:[%s196 + $0xa8] sm:$0xff]
        %v229 = vld [vmem:[%s196 + $0xb0] sm:$0xff]
        %v230 = vld [vmem:[%s196 + $0xb8] sm:$0xff]
        %v231 = vld [vmem:[%s196 + $0xc0] sm:$0xff]
        %v232 = vld [vmem:[%s196 + $0xc8] sm:$0xff]
        %v233 = vld [vmem:[%s196 + $0xd0] sm:$0xff]
        %v234 = vld [vmem:[%s196 + $0xd8] sm:$0xff]
        %v235 = vmul.f32 %v207, %v207
        %v236 = vmul.f32 %v208, %v208
        %v237 = vmul.f32 %v209, %v209
        %v238 = vmul.f32 %v210, %v210
        %v239 = vmul.f32 %v211, %v211
        %v240 = vmul.f32 %v212, %v212
        %v241 = vmul.f32 %v213, %v213
        %v242 = vmul.f32 %v214, %v214
        %v243 = vmul.f32 %v215, %v215
        %v244 = vmul.f32 %v216, %v216
        %v245 = vmul.f32 %v217, %v217
        %v246 = vmul.f32 %v218, %v218
        %v247 = vmul.f32 %v219, %v219
        %v248 = vmul.f32 %v220, %v220
        %v249 = vmul.f32 %v221, %v221
        %v250 = vmul.f32 %v222, %v222
        %v251 = vmul.f32 %v223, %v223
        %v252 = vmul.f32 %v224, %v224
        %v253 = vmul.f32 %v225, %v225
        %v254 = vmul.f32 %v226, %v226
        %v255 = vmul.f32 %v227, %v227
        %v256 = vmul.f32 %v228, %v228
        %v257 = vmul.f32 %v229, %v229
        %v258 = vmul.f32 %v230, %v230
        %v259 = vmul.f32 %v231, %v231
        %v260 = vmul.f32 %v232, %v232
        %v261 = vmul.f32 %v233, %v233
        %v262 = vmul.f32 %v234, %v234
        %vm263 = vcmask 293888
        %v264 = vsel %vm263, %v235, 0.0
        %265 = vadd.xlane.f32.xlu0 %v264
        %v266 = vpop.xlane.xlu0 %265
        %v267 = vsel %vm263, %v236, 0.0
        %268 = vadd.xlane.f32.xlu0 %v267
        %v269 = vpop.xlane.xlu0 %268
        %v270 = vsel %vm263, %v237, 0.0
        %271 = vadd.xlane.f32.xlu0 %v270
        %v272 = vpop.xlane.xlu0 %271
        %v273 = vsel %vm263, %v238, 0.0
        %274 = vadd.xlane.f32.xlu0 %v273
        %v275 = vpop.xlane.xlu0 %274
        %v276 = vsel %vm263, %v239, 0.0
        %277 = vadd.xlane.f32.xlu0 %v276
        %v278 = vpop.xlane.xlu0 %277
        %v279 = vsel %vm263, %v240, 0.0
        %280 = vadd.xlane.f32.xlu0 %v279
        %v281 = vpop.xlane.xlu0 %280
        %v282 = vsel %vm263, %v241, 0.0
        %283 = vadd.xlane.f32.xlu0 %v282
        %v284 = vpop.xlane.xlu0 %283
        %v285 = vsel %vm263, %v242, 0.0
        %286 = vadd.xlane.f32.xlu0 %v285
        %v287 = vpop.xlane.xlu0 %286
        %v288 = vsel %vm263, %v243, 0.0
        %289 = vadd.xlane.f32.xlu0 %v288
        %v290 = vpop.xlane.xlu0 %289
        %v291 = vsel %vm263, %v244, 0.0
        %292 = vadd.xlane.f32.xlu0 %v291
        %v293 = vpop.xlane.xlu0 %292
        %v294 = vsel %vm263, %v245, 0.0
        %295 = vadd.xlane.f32.xlu0 %v294
        %v296 = vpop.xlane.xlu0 %295
        %v297 = vsel %vm263, %v246, 0.0
        %298 = vadd.xlane.f32.xlu0 %v297
        %v299 = vpop.xlane.xlu0 %298
        %v300 = vsel %vm263, %v247, 0.0
        %301 = vadd.xlane.f32.xlu0 %v300
        %v302 = vpop.xlane.xlu0 %301
        %v303 = vsel %vm263, %v248, 0.0
        %304 = vadd.xlane.f32.xlu0 %v303
        %v305 = vpop.xlane.xlu0 %304
        %v306 = vsel %vm263, %v249, 0.0
        %307 = vadd.xlane.f32.xlu0 %v306
        %v308 = vpop.xlane.xlu0 %307
        %v309 = vsel %vm263, %v250, 0.0
        %310 = vadd.xlane.f32.xlu0 %v309
        %v311 = vpop.xlane.xlu0 %310
        %v312 = vsel %vm263, %v251, 0.0
        %313 = vadd.xlane.f32.xlu0 %v312
        %v314 = vpop.xlane.xlu0 %313
        %v315 = vsel %vm263, %v252, 0.0
        %316 = vadd.xlane.f32.xlu0 %v315
        %v317 = vpop.xlane.xlu0 %316
        %v318 = vsel %vm263, %v253, 0.0
        %319 = vadd.xlane.f32.xlu0 %v318
        %v320 = vpop.xlane.xlu0 %319
        %v321 = vsel %vm263, %v254, 0.0
        %322 = vadd.xlane.f32.xlu0 %v321
        %v323 = vpop.xlane.xlu0 %322
        %v324 = vsel %vm263, %v255, 0.0
        %325 = vadd.xlane.f32.xlu0 %v324
        %v326 = vpop.xlane.xlu0 %325
        %v327 = vsel %vm263, %v256, 0.0
        %328 = vadd.xlane.f32.xlu0 %v327
        %v329 = vpop.xlane.xlu0 %328
        %v330 = vsel %vm263, %v257, 0.0
        %331 = vadd.xlane.f32.xlu0 %v330
        %v332 = vpop.xlane.xlu0 %331
        %v333 = vsel %vm263, %v258, 0.0
        %334 = vadd.xlane.f32.xlu0 %v333
        %v335 = vpop.xlane.xlu0 %334
        %v336 = vsel %vm263, %v259, 0.0
        %337 = vadd.xlane.f32.xlu0 %v336
        %v338 = vpop.xlane.xlu0 %337
        %v339 = vsel %vm263, %v260, 0.0
        %340 = vadd.xlane.f32.xlu0 %v339
        %v341 = vpop.xlane.xlu0 %340
        %v342 = vsel %vm263, %v261, 0.0
        %343 = vadd.xlane.f32.xlu0 %v342
        %v344 = vpop.xlane.xlu0 %343
        %v345 = vsel %vm263, %v262, 0.0
        %346 = vadd.xlane.f32.xlu0 %v345
        %v347 = vpop.xlane.xlu0 %346
        %v348 = vld [vmem:[%s182] sm:$0xff]
        %v349 = vld [vmem:[%s182 + $0x8] sm:$0xff]
        %v350 = vld [vmem:[%s182 + $0x10] sm:$0xff]
        %v351 = vld [vmem:[%s182 + $0x18] sm:$0xff]
        %v352 = vld [vmem:[%s182 + $0x20] sm:$0xff]
        %v353 = vld [vmem:[%s182 + $0x28] sm:$0xff]
        %v354 = vld [vmem:[%s182 + $0x30] sm:$0xff]
        %v355 = vld [vmem:[%s182 + $0x38] sm:$0xff]
        %v356 = vld [vmem:[%s182 + $0x40] sm:$0xff]
        %v357 = vld [vmem:[%s182 + $0x48] sm:$0xff]
        %v358 = vld [vmem:[%s182 + $0x50] sm:$0xff]
        %v359 = vld [vmem:[%s182 + $0x58] sm:$0xff]
        %v360 = vld [vmem:[%s182 + $0x60] sm:$0xff]
        %v361 = vld [vmem:[%s182 + $0x68] sm:$0xff]
        %v362 = vld [vmem:[%s182 + $0x70] sm:$0xff]
        %v363 = vld [vmem:[%s182 + $0x78] sm:$0xff]
        %v364 = vld [vmem:[%s182 + $0x80] sm:$0xff]
        %v365 = vld [vmem:[%s182 + $0x88] sm:$0xff]
        %v366 = vld [vmem:[%s182 + $0x90] sm:$0xff]
        %v367 = vld [vmem:[%s182 + $0x98] sm:$0xff]
        %v368 = vld [vmem:[%s182 + $0xa0] sm:$0xff]
        %v369 = vld [vmem:[%s182 + $0xa8] sm:$0xff]
        %v370 = vld [vmem:[%s182 + $0xb0] sm:$0xff]
        %v371 = vld [vmem:[%s182 + $0xb8] sm:$0xff]
        %v372 = vld [vmem:[%s182 + $0xc0] sm:$0xff]
        %v373 = vld [vmem:[%s182 + $0xc8] sm:$0xff]
        %v374 = vld [vmem:[%s182 + $0xd0] sm:$0xff]
        %v375 = vld [vmem:[%s182 + $0xd8] sm:$0xff]
        %v376 = vmax.f32 %v266, 1e-16
        %v377 = vmax.f32 %v269, 1e-16
        %v378 = vmax.f32 %v272, 1e-16
        %v379 = vmax.f32 %v275, 1e-16
        %v380 = vmax.f32 %v278, 1e-16
        %v381 = vmax.f32 %v281, 1e-16
        %v382 = vmax.f32 %v284, 1e-16
        %v383 = vmax.f32 %v287, 1e-16
        %v384 = vmax.f32 %v290, 1e-16
        %v385 = vmax.f32 %v293, 1e-16
        %v386 = vmax.f32 %v296, 1e-16
        %v387 = vmax.f32 %v299, 1e-16
        %v388 = vmax.f32 %v302, 1e-16
        %v389 = vmax.f32 %v305, 1e-16
        %v390 = vmax.f32 %v308, 1e-16
        %v391 = vmax.f32 %v311, 1e-16
        %v392 = vmax.f32 %v314, 1e-16
        %v393 = vmax.f32 %v317, 1e-16
        %v394 = vmax.f32 %v320, 1e-16
        %v395 = vmax.f32 %v323, 1e-16
        %v396 = vmax.f32 %v326, 1e-16
        %v397 = vmax.f32 %v329, 1e-16
        %v398 = vmax.f32 %v332, 1e-16
        %v399 = vmax.f32 %v335, 1e-16
        %v400 = vmax.f32 %v338, 1e-16
        %v401 = vmax.f32 %v341, 1e-16
        %v402 = vmax.f32 %v344, 1e-16
        %v403 = vmax.f32 %v347, 1e-16
        %v404 = vrsqrt.pop %v376
        %v405 = vmul.f32 %v404, %v376
        %v406 = vmul.f32 %v405, %v404
        %v407 = vmul.f32 0.5, %v406
        %v408 = vsub.f32 1.5, %v407
        %v409 = vmul.f32 %v404, %v408
        %vm410 = vweird.f32 %v376
        %vm411 = vweird.f32 %v404
        %vm412 = vmor %vm410, %vm411
        %v413 = vsel %vm412, %v404, %v409
        %v414 = vrsqrt.pop %v377
        %v415 = vmul.f32 %v414, %v377
        %v416 = vmul.f32 %v415, %v414
        %v417 = vmul.f32 0.5, %v416
        %v418 = vsub.f32 1.5, %v417
        %v419 = vmul.f32 %v414, %v418
        %vm420 = vweird.f32 %v377
        %vm421 = vweird.f32 %v414
        %vm422 = vmor %vm420, %vm421
        %v423 = vsel %vm422, %v414, %v419
        %v424 = vrsqrt.pop %v378
        %v425 = vmul.f32 %v424, %v378
        %v426 = vmul.f32 %v425, %v424
        %v427 = vmul.f32 0.5, %v426
        %v428 = vsub.f32 1.5, %v427
        %v429 = vmul.f32 %v424, %v428
        %vm430 = vweird.f32 %v378
        %vm431 = vweird.f32 %v424
        %vm432 = vmor %vm430, %vm431
        %v433 = vsel %vm432, %v424, %v429
        %v434 = vrsqrt.pop %v379
        %v435 = vmul.f32 %v434, %v379
        %v436 = vmul.f32 %v435, %v434
        %v437 = vmul.f32 0.5, %v436
        %v438 = vsub.f32 1.5, %v437
        %v439 = vmul.f32 %v434, %v438
        %vm440 = vweird.f32 %v379
        %vm441 = vweird.f32 %v434
        %vm442 = vmor %vm440, %vm441
        %v443 = vsel %vm442, %v434, %v439
        %v444 = vrsqrt.pop %v380
        %v445 = vmul.f32 %v444, %v380
        %v446 = vmul.f32 %v445, %v444
        %v447 = vmul.f32 0.5, %v446
        %v448 = vsub.f32 1.5, %v447
        %v449 = vmul.f32 %v444, %v448
        %vm450 = vweird.f32 %v380
        %vm451 = vweird.f32 %v444
        %vm452 = vmor %vm450, %vm451
        %v453 = vsel %vm452, %v444, %v449
        %v454 = vrsqrt.pop %v381
        %v455 = vmul.f32 %v454, %v381
        %v456 = vmul.f32 %v455, %v454
        %v457 = vmul.f32 0.5, %v456
        %v458 = vsub.f32 1.5, %v457
        %v459 = vmul.f32 %v454, %v458
        %vm460 = vweird.f32 %v381
        %vm461 = vweird.f32 %v454
        %vm462 = vmor %vm460, %vm461
        %v463 = vsel %vm462, %v454, %v459
        %v464 = vrsqrt.pop %v382
        %v465 = vmul.f32 %v464, %v382
        %v466 = vmul.f32 %v465, %v464
        %v467 = vmul.f32 0.5, %v466
        %v468 = vsub.f32 1.5, %v467
        %v469 = vmul.f32 %v464, %v468
        %vm470 = vweird.f32 %v382
        %vm471 = vweird.f32 %v464
        %vm472 = vmor %vm470, %vm471
        %v473 = vsel %vm472, %v464, %v469
        %v474 = vrsqrt.pop %v383
        %v475 = vmul.f32 %v474, %v383
        %v476 = vmul.f32 %v475, %v474
        %v477 = vmul.f32 0.5, %v476
        %v478 = vsub.f32 1.5, %v477
        %v479 = vmul.f32 %v474, %v478
        %vm480 = vweird.f32 %v383
        %vm481 = vweird.f32 %v474
        %vm482 = vmor %vm480, %vm481
        %v483 = vsel %vm482, %v474, %v479
        %v484 = vrsqrt.pop %v384
        %v485 = vmul.f32 %v484, %v384
        %v486 = vmul.f32 %v485, %v484
        %v487 = vmul.f32 0.5, %v486
        %v488 = vsub.f32 1.5, %v487
        %v489 = vmul.f32 %v484, %v488
        %vm490 = vweird.f32 %v384
        %vm491 = vweird.f32 %v484
        %vm492 = vmor %vm490, %vm491
        %v493 = vsel %vm492, %v484, %v489
        %v494 = vrsqrt.pop %v385
        %v495 = vmul.f32 %v494, %v385
        %v496 = vmul.f32 %v495, %v494
        %v497 = vmul.f32 0.5, %v496
        %v498 = vsub.f32 1.5, %v497
        %v499 = vmul.f32 %v494, %v498
        %vm500 = vweird.f32 %v385
        %vm501 = vweird.f32 %v494
        %vm502 = vmor %vm500, %vm501
        %v503 = vsel %vm502, %v494, %v499
        %v504 = vrsqrt.pop %v386
        %v505 = vmul.f32 %v504, %v386
        %v506 = vmul.f32 %v505, %v504
        %v507 = vmul.f32 0.5, %v506
        %v508 = vsub.f32 1.5, %v507
        %v509 = vmul.f32 %v504, %v508
        %vm510 = vweird.f32 %v386
        %vm511 = vweird.f32 %v504
        %vm512 = vmor %vm510, %vm511
        %v513 = vsel %vm512, %v504, %v509
        %v514 = vrsqrt.pop %v387
        %v515 = vmul.f32 %v514, %v387
        %v516 = vmul.f32 %v515, %v514
        %v517 = vmul.f32 0.5, %v516
        %v518 = vsub.f32 1.5, %v517
        %v519 = vmul.f32 %v514, %v518
        %vm520 = vweird.f32 %v387
        %vm521 = vweird.f32 %v514
        %vm522 = vmor %vm520, %vm521
        %v523 = vsel %vm522, %v514, %v519
        %v524 = vrsqrt.pop %v388
        %v525 = vmul.f32 %v524, %v388
        %v526 = vmul.f32 %v525, %v524
        %v527 = vmul.f32 0.5, %v526
        %v528 = vsub.f32 1.5, %v527
        %v529 = vmul.f32 %v524, %v528
        %vm530 = vweird.f32 %v388
        %vm531 = vweird.f32 %v524
        %vm532 = vmor %vm530, %vm531
        %v533 = vsel %vm532, %v524, %v529
        %v534 = vrsqrt.pop %v389
        %v535 = vmul.f32 %v534, %v389
        %v536 = vmul.f32 %v535, %v534
        %v537 = vmul.f32 0.5, %v536
        %v538 = vsub.f32 1.5, %v537
        %v539 = vmul.f32 %v534, %v538
        %vm540 = vweird.f32 %v389
        %vm541 = vweird.f32 %v534
        %vm542 = vmor %vm540, %vm541
        %v543 = vsel %vm542, %v534, %v539
        %v544 = vrsqrt.pop %v390
        %v545 = vmul.f32 %v544, %v390
        %v546 = vmul.f32 %v545, %v544
        %v547 = vmul.f32 0.5, %v546
        %v548 = vsub.f32 1.5, %v547
        %v549 = vmul.f32 %v544, %v548
        %vm550 = vweird.f32 %v390
        %vm551 = vweird.f32 %v544
        %vm552 = vmor %vm550, %vm551
        %v553 = vsel %vm552, %v544, %v549
        %v554 = vrsqrt.pop %v391
        %v555 = vmul.f32 %v554, %v391
        %v556 = vmul.f32 %v555, %v554
        %v557 = vmul.f32 0.5, %v556
        %v558 = vsub.f32 1.5, %v557
        %v559 = vmul.f32 %v554, %v558
        %vm560 = vweird.f32 %v391
        %vm561 = vweird.f32 %v554
        %vm562 = vmor %vm560, %vm561
        %v563 = vsel %vm562, %v554, %v559
        %v564 = vrsqrt.pop %v392
        %v565 = vmul.f32 %v564, %v392
        %v566 = vmul.f32 %v565, %v564
        %v567 = vmul.f32 0.5, %v566
        %v568 = vsub.f32 1.5, %v567
        %v569 = vmul.f32 %v564, %v568
        %vm570 = vweird.f32 %v392
        %vm571 = vweird.f32 %v564
        %vm572 = vmor %vm570, %vm571
        %v573 = vsel %vm572, %v564, %v569
        %v574 = vrsqrt.pop %v393
        %v575 = vmul.f32 %v574, %v393
        %v576 = vmul.f32 %v575, %v574
        %v577 = vmul.f32 0.5, %v576
        %v578 = vsub.f32 1.5, %v577
        %v579 = vmul.f32 %v574, %v578
        %vm580 = vweird.f32 %v393
        %vm581 = vweird.f32 %v574
        %vm582 = vmor %vm580, %vm581
        %v583 = vsel %vm582, %v574, %v579
        %v584 = vrsqrt.pop %v394
        %v585 = vmul.f32 %v584, %v394
        %v586 = vmul.f32 %v585, %v584
        %v587 = vmul.f32 0.5, %v586
        %v588 = vsub.f32 1.5, %v587
        %v589 = vmul.f32 %v584, %v588
        %vm590 = vweird.f32 %v394
        %vm591 = vweird.f32 %v584
        %vm592 = vmor %vm590, %vm591
        %v593 = vsel %vm592, %v584, %v589
        %v594 = vrsqrt.pop %v395
        %v595 = vmul.f32 %v594, %v395
        %v596 = vmul.f32 %v595, %v594
        %v597 = vmul.f32 0.5, %v596
        %v598 = vsub.f32 1.5, %v597
        %v599 = vmul.f32 %v594, %v598
        %vm600 = vweird.f32 %v395
        %vm601 = vweird.f32 %v594
        %vm602 = vmor %vm600, %vm601
        %v603 = vsel %vm602, %v594, %v599
        %v604 = vrsqrt.pop %v396
        %v605 = vmul.f32 %v604, %v396
        %v606 = vmul.f32 %v605, %v604
        %v607 = vmul.f32 0.5, %v606
        %v608 = vsub.f32 1.5, %v607
        %v609 = vmul.f32 %v604, %v608
        %vm610 = vweird.f32 %v396
        %vm611 = vweird.f32 %v604
        %vm612 = vmor %vm610, %vm611
        %v613 = vsel %vm612, %v604, %v609
        %v614 = vrsqrt.pop %v397
        %v615 = vmul.f32 %v614, %v397
        %v616 = vmul.f32 %v615, %v614
        %v617 = vmul.f32 0.5, %v616
        %v618 = vsub.f32 1.5, %v617
        %v619 = vmul.f32 %v614, %v618
        %vm620 = vweird.f32 %v397
        %vm621 = vweird.f32 %v614
        %vm622 = vmor %vm620, %vm621
        %v623 = vsel %vm622, %v614, %v619
        %v624 = vrsqrt.pop %v398
        %v625 = vmul.f32 %v624, %v398
        %v626 = vmul.f32 %v625, %v624
        %v627 = vmul.f32 0.5, %v626
        %v628 = vsub.f32 1.5, %v627
        %v629 = vmul.f32 %v624, %v628
        %vm630 = vweird.f32 %v398
        %vm631 = vweird.f32 %v624
        %vm632 = vmor %vm630, %vm631
        %v633 = vsel %vm632, %v624, %v629
        %v634 = vrsqrt.pop %v399
        %v635 = vmul.f32 %v634, %v399
        %v636 = vmul.f32 %v635, %v634
        %v637 = vmul.f32 0.5, %v636
        %v638 = vsub.f32 1.5, %v637
        %v639 = vmul.f32 %v634, %v638
        %vm640 = vweird.f32 %v399
        %vm641 = vweird.f32 %v634
        %vm642 = vmor %vm640, %vm641
        %v643 = vsel %vm642, %v634, %v639
        %v644 = vrsqrt.pop %v400
        %v645 = vmul.f32 %v644, %v400
        %v646 = vmul.f32 %v645, %v644
        %v647 = vmul.f32 0.5, %v646
        %v648 = vsub.f32 1.5, %v647
        %v649 = vmul.f32 %v644, %v648
        %vm650 = vweird.f32 %v400
        %vm651 = vweird.f32 %v644
        %vm652 = vmor %vm650, %vm651
        %v653 = vsel %vm652, %v644, %v649
        %v654 = vrsqrt.pop %v401
        %v655 = vmul.f32 %v654, %v401
        %v656 = vmul.f32 %v655, %v654
        %v657 = vmul.f32 0.5, %v656
        %v658 = vsub.f32 1.5, %v657
        %v659 = vmul.f32 %v654, %v658
        %vm660 = vweird.f32 %v401
        %vm661 = vweird.f32 %v654
        %vm662 = vmor %vm660, %vm661
        %v663 = vsel %vm662, %v654, %v659
        %v664 = vrsqrt.pop %v402
        %v665 = vmul.f32 %v664, %v402
        %v666 = vmul.f32 %v665, %v664
        %v667 = vmul.f32 0.5, %v666
        %v668 = vsub.f32 1.5, %v667
        %v669 = vmul.f32 %v664, %v668
        %vm670 = vweird.f32 %v402
        %vm671 = vweird.f32 %v664
        %vm672 = vmor %vm670, %vm671
        %v673 = vsel %vm672, %v664, %v669
        %v674 = vrsqrt.pop %v403
        %v675 = vmul.f32 %v674, %v403
        %v676 = vmul.f32 %v675, %v674
        %v677 = vmul.f32 0.5, %v676
        %v678 = vsub.f32 1.5, %v677
        %v679 = vmul.f32 %v674, %v678
        %vm680 = vweird.f32 %v403
        %vm681 = vweird.f32 %v674
        %vm682 = vmor %vm680, %vm681
        %v683 = vsel %vm682, %v674, %v679
        %v684 = vmul.f32 %v348, %v413
        %v685 = vmul.f32 %v349, %v423
        %v686 = vmul.f32 %v350, %v433
        %v687 = vmul.f32 %v351, %v443
        %v688 = vmul.f32 %v352, %v453
        %v689 = vmul.f32 %v353, %v463
        %v690 = vmul.f32 %v354, %v473
        %v691 = vmul.f32 %v355, %v483
        %v692 = vmul.f32 %v356, %v493
        %v693 = vmul.f32 %v357, %v503
        %v694 = vmul.f32 %v358, %v513
        %v695 = vmul.f32 %v359, %v523
        %v696 = vmul.f32 %v360, %v533
        %v697 = vmul.f32 %v361, %v543
        %v698 = vmul.f32 %v362, %v553
        %v699 = vmul.f32 %v363, %v563
        %v700 = vmul.f32 %v364, %v573
        %v701 = vmul.f32 %v365, %v583
        %v702 = vmul.f32 %v366, %v593
        %v703 = vmul.f32 %v367, %v603
        %v704 = vmul.f32 %v368, %v613
        %v705 = vmul.f32 %v369, %v623
        %v706 = vmul.f32 %v370, %v633
        %v707 = vmul.f32 %v371, %v643
        %v708 = vmul.f32 %v372, %v653
        %v709 = vmul.f32 %v373, %v663
        %v710 = vmul.f32 %v374, %v673
        %v711 = vmul.f32 %v375, %v683
        %713 = vset.pattern.permute.xlu0 0
        %714 = vperm.xlu0 %713, %v684
        %v715 = vpop.permute.xlu0 %714
        %718 = vset.pattern.permute.xlu0 0
        %719 = vperm.xlu0 %718, %v685
        %v720 = vpop.permute.xlu0 %719
        %723 = vset.pattern.permute.xlu0 0
        %724 = vperm.xlu0 %723, %v686
        %v725 = vpop.permute.xlu0 %724
        %728 = vset.pattern.permute.xlu0 0
        %729 = vperm.xlu0 %728, %v687
        %v730 = vpop.permute.xlu0 %729
        %733 = vset.pattern.permute.xlu0 0
        %734 = vperm.xlu0 %733, %v688
        %v735 = vpop.permute.xlu0 %734
        %738 = vset.pattern.permute.xlu0 0
        %739 = vperm.xlu0 %738, %v689
        %v740 = vpop.permute.xlu0 %739
        %743 = vset.pattern.permute.xlu0 0
        %744 = vperm.xlu0 %743, %v690
        %v745 = vpop.permute.xlu0 %744
        %748 = vset.pattern.permute.xlu0 0
        %749 = vperm.xlu0 %748, %v691
        %v750 = vpop.permute.xlu0 %749
        %753 = vset.pattern.permute.xlu0 0
        %754 = vperm.xlu0 %753, %v692
        %v755 = vpop.permute.xlu0 %754
        %758 = vset.pattern.permute.xlu0 0
        %759 = vperm.xlu0 %758, %v693
        %v760 = vpop.permute.xlu0 %759
        %763 = vset.pattern.permute.xlu0 0
        %764 = vperm.xlu0 %763, %v694
        %v765 = vpop.permute.xlu0 %764
        %768 = vset.pattern.permute.xlu0 0
        %769 = vperm.xlu0 %768, %v695
        %v770 = vpop.permute.xlu0 %769
        %773 = vset.pattern.permute.xlu0 0
        %774 = vperm.xlu0 %773, %v696
        %v775 = vpop.permute.xlu0 %774
        %778 = vset.pattern.permute.xlu0 0
        %779 = vperm.xlu0 %778, %v697
        %v780 = vpop.permute.xlu0 %779
        %783 = vset.pattern.permute.xlu0 0
        %784 = vperm.xlu0 %783, %v698
        %v785 = vpop.permute.xlu0 %784
        %788 = vset.pattern.permute.xlu0 0
        %789 = vperm.xlu0 %788, %v699
        %v790 = vpop.permute.xlu0 %789
        %793 = vset.pattern.permute.xlu0 0
        %794 = vperm.xlu0 %793, %v700
        %v795 = vpop.permute.xlu0 %794
        %798 = vset.pattern.permute.xlu0 0
        %799 = vperm.xlu0 %798, %v701
        %v800 = vpop.permute.xlu0 %799
        %803 = vset.pattern.permute.xlu0 0
        %804 = vperm.xlu0 %803, %v702
        %v805 = vpop.permute.xlu0 %804
        %808 = vset.pattern.permute.xlu0 0
        %809 = vperm.xlu0 %808, %v703
        %v810 = vpop.permute.xlu0 %809
        %813 = vset.pattern.permute.xlu0 0
        %814 = vperm.xlu0 %813, %v704
        %v815 = vpop.permute.xlu0 %814
        %818 = vset.pattern.permute.xlu0 0
        %819 = vperm.xlu0 %818, %v705
        %v820 = vpop.permute.xlu0 %819
        %823 = vset.pattern.permute.xlu0 0
        %824 = vperm.xlu0 %823, %v706
        %v825 = vpop.permute.xlu0 %824
        %828 = vset.pattern.permute.xlu0 0
        %829 = vperm.xlu0 %828, %v707
        %v830 = vpop.permute.xlu0 %829
        %833 = vset.pattern.permute.xlu0 0
        %834 = vperm.xlu0 %833, %v708
        %v835 = vpop.permute.xlu0 %834
        %838 = vset.pattern.permute.xlu0 0
        %839 = vperm.xlu0 %838, %v709
        %v840 = vpop.permute.xlu0 %839
        %843 = vset.pattern.permute.xlu0 0
        %844 = vperm.xlu0 %843, %v710
        %v845 = vpop.permute.xlu0 %844
        %848 = vset.pattern.permute.xlu0 0
        %849 = vperm.xlu0 %848, %v711
        %v850 = vpop.permute.xlu0 %849
        %v852 = vmul.f32 %v207, %v715
        %v853 = vmul.f32 %v208, %v720
        %v854 = vmul.f32 %v209, %v725
        %v855 = vmul.f32 %v210, %v730
        %v856 = vmul.f32 %v211, %v735
        %v857 = vmul.f32 %v212, %v740
        %v858 = vmul.f32 %v213, %v745
        %v859 = vmul.f32 %v214, %v750
        %v860 = vmul.f32 %v215, %v755
        %v861 = vmul.f32 %v216, %v760
        %v862 = vmul.f32 %v217, %v765
        %v863 = vmul.f32 %v218, %v770
        %v864 = vmul.f32 %v219, %v775
        %v865 = vmul.f32 %v220, %v780
        %v866 = vmul.f32 %v221, %v785
        %v867 = vmul.f32 %v222, %v790
        %v868 = vmul.f32 %v223, %v795
        %v869 = vmul.f32 %v224, %v800
        %v870 = vmul.f32 %v225, %v805
        %v871 = vmul.f32 %v226, %v810
        %v872 = vmul.f32 %v227, %v815
        %v873 = vmul.f32 %v228, %v820
        %v874 = vmul.f32 %v229, %v825
        %v875 = vmul.f32 %v230, %v830
        %v876 = vmul.f32 %v231, %v835
        %v877 = vmul.f32 %v232, %v840
        %v878 = vmul.f32 %v233, %v845
        %v879 = vmul.f32 %v234, %v850
        %880 = vst.msk [vmem:[%s173] sm:$0xff] %vm263, %v852
        %881 = vst.msk [vmem:[%s173 + $0x8] sm:$0xff] %vm263, %v853
        %882 = vst.msk [vmem:[%s173 + $0x10] sm:$0xff] %vm263, %v854
        %883 = vst.msk [vmem:[%s173 + $0x18] sm:$0xff] %vm263, %v855
        %884 = vst.msk [vmem:[%s173 + $0x20] sm:$0xff] %vm263, %v856
        %885 = vst.msk [vmem:[%s173 + $0x28] sm:$0xff] %vm263, %v857
        %886 = vst.msk [vmem:[%s173 + $0x30] sm:$0xff] %vm263, %v858
        %887 = vst.msk [vmem:[%s173 + $0x38] sm:$0xff] %vm263, %v859
        %888 = vst.msk [vmem:[%s173 + $0x40] sm:$0xff] %vm263, %v860
        %889 = vst.msk [vmem:[%s173 + $0x48] sm:$0xff] %vm263, %v861
        %890 = vst.msk [vmem:[%s173 + $0x50] sm:$0xff] %vm263, %v862
        %891 = vst.msk [vmem:[%s173 + $0x58] sm:$0xff] %vm263, %v863
        %892 = vst.msk [vmem:[%s173 + $0x60] sm:$0xff] %vm263, %v864
        %893 = vst.msk [vmem:[%s173 + $0x68] sm:$0xff] %vm263, %v865
        %894 = vst.msk [vmem:[%s173 + $0x70] sm:$0xff] %vm263, %v866
        %895 = vst.msk [vmem:[%s173 + $0x78] sm:$0xff] %vm263, %v867
        %896 = vst.msk [vmem:[%s173 + $0x80] sm:$0xff] %vm263, %v868
        %897 = vst.msk [vmem:[%s173 + $0x88] sm:$0xff] %vm263, %v869
        %898 = vst.msk [vmem:[%s173 + $0x90] sm:$0xff] %vm263, %v870
        %899 = vst.msk [vmem:[%s173 + $0x98] sm:$0xff] %vm263, %v871
        %900 = vst.msk [vmem:[%s173 + $0xa0] sm:$0xff] %vm263, %v872
        %901 = vst.msk [vmem:[%s173 + $0xa8] sm:$0xff] %vm263, %v873
        %902 = vst.msk [vmem:[%s173 + $0xb0] sm:$0xff] %vm263, %v874
        %903 = vst.msk [vmem:[%s173 + $0xb8] sm:$0xff] %vm263, %v875
        %904 = vst.msk [vmem:[%s173 + $0xc0] sm:$0xff] %vm263, %v876
        %905 = vst.msk [vmem:[%s173 + $0xc8] sm:$0xff] %vm263, %v877
        %906 = vst.msk [vmem:[%s173 + $0xd0] sm:$0xff] %vm263, %v878
        %907 = vst.msk [vmem:[%s173 + $0xd8] sm:$0xff] %vm263, %v879
        %s908 = sand.u32 %s73, 1
        %s909 = sand.u32 %s73, 1
        %s910 = smul.addr %s909, 224
        %s911 = scalar_lea.vmem [#allocation2], %s910
        // Predicated region
        $region29: #{tpu_custom_call.1} parent=27 // pred_check
          %p912 = pneg %p83
        $region30: #{tpu_custom_call.1} parent=27 // pred_check_branch
          %914 = sbr.rel (%p912) target = $region32
        $region31: #{tpu_custom_call.1} parent=27 // pred_region
          %s915 = smul.u32 28, %s13
          %s916 = ssub.s32 64, %s915
          %p917 = scmp.lt.s32.totalorder %s916, 28
          %s918 = scalar_select %p917, %s916, 28
          %s919 = smul.u32 8, %s918
          %p920 = scmp.ne.s32.totalorder 0, %s919
          %s921 = smul.addr %s915, 8
          %s922 = scalar_lea.vmem %s2, %s921
          // Predicated region
          $region33: #{tpu_custom_call.1} parent=31 // pred_check
            %p923 = pneg %p920
          $region34: #{tpu_custom_call.1} parent=31 // pred_check_branch
            %925 = sbr.rel (%p923) target = $region36
          $region35: #{tpu_custom_call.1} parent=31 // pred_region
            // Predicated region
            $region37: #{tpu_custom_call.1} parent=35 // pred_check
              _
            $region38: #{tpu_custom_call.1} parent=35 // pred_check_branch
              %927 = sbr.rel (0) target = $region40
            $region39: #{tpu_custom_call.1} parent=35 // pred_region
              // Predicated region
              $region59: #{tpu_custom_call.1} parent=39 // pred_check
                _
              $region60: #{tpu_custom_call.1} parent=39 // pred_check_branch
                %1032 = sbr.rel (0) target = $region62
              $region61: #{tpu_custom_call.1} parent=39 // pred_region
                %s1033 = sdiv.u32.pop %s918, 28
                %s1034 = srem.u32.pop %s918, 28
                // While loop
                $region63: #{tpu_custom_call.1} parent=61 // loop_pre_header
                  _
                $region64: #{tpu_custom_call.1} parent=61 // loop_header
                  %s1036 = sphi 0, %s1038
                  %p1037 = scmp.ge.s32.totalorder %s1036, %s1033
                  %s1041 = sphi 0, %s1102
                  %s1042 = sphi %s911, %s1105
                  %s1043 = sphi %s922, %s1106
                $region65: #{tpu_custom_call.1} parent=61 // loop_header_branch
                  %1040 = sbr.rel (%p1037) target = $region69
                $region66: #{tpu_custom_call.1} parent=61 // loop_body
                  %v1044 = vld [vmem:[%s1042] sm:$0xff]
                  %1045 = vst [vmem:[%s1043] sm:$0xff] %v1044
                  %v1046 = vld [vmem:[%s1042 + $0x8] sm:$0xff]
                  %1047 = vst [vmem:[%s1043 + $0x8] sm:$0xff] %v1046
                  %v1048 = vld [vmem:[%s1042 + $0x10] sm:$0xff]
                  %1049 = vst [vmem:[%s1043 + $0x10] sm:$0xff] %v1048
                  %v1050 = vld [vmem:[%s1042 + $0x18] sm:$0xff]
                  %1051 = vst [vmem:[%s1043 + $0x18] sm:$0xff] %v1050
                  %v1052 = vld [vmem:[%s1042 + $0x20] sm:$0xff]
                  %1053 = vst [vmem:[%s1043 + $0x20] sm:$0xff] %v1052
                  %v1054 = vld [vmem:[%s1042 + $0x28] sm:$0xff]
                  %1055 = vst [vmem:[%s1043 + $0x28] sm:$0xff] %v1054
                  %v1056 = vld [vmem:[%s1042 + $0x30] sm:$0xff]
                  %1057 = vst [vmem:[%s1043 + $0x30] sm:$0xff] %v1056
                  %v1058 = vld [vmem:[%s1042 + $0x38] sm:$0xff]
                  %1059 = vst [vmem:[%s1043 + $0x38] sm:$0xff] %v1058
                  %v1060 = vld [vmem:[%s1042 + $0x40] sm:$0xff]
                  %1061 = vst [vmem:[%s1043 + $0x40] sm:$0xff] %v1060
                  %v1062 = vld [vmem:[%s1042 + $0x48] sm:$0xff]
                  %1063 = vst [vmem:[%s1043 + $0x48] sm:$0xff] %v1062
                  %v1064 = vld [vmem:[%s1042 + $0x50] sm:$0xff]
                  %1065 = vst [vmem:[%s1043 + $0x50] sm:$0xff] %v1064
                  %v1066 = vld [vmem:[%s1042 + $0x58] sm:$0xff]
                  %1067 = vst [vmem:[%s1043 + $0x58] sm:$0xff] %v1066
                  %v1068 = vld [vmem:[%s1042 + $0x60] sm:$0xff]
                  %1069 = vst [vmem:[%s1043 + $0x60] sm:$0xff] %v1068
                  %v1070 = vld [vmem:[%s1042 + $0x68] sm:$0xff]
                  %1071 = vst [vmem:[%s1043 + $0x68] sm:$0xff] %v1070
                  %v1072 = vld [vmem:[%s1042 + $0x70] sm:$0xff]
                  %1073 = vst [vmem:[%s1043 + $0x70] sm:$0xff] %v1072
                  %v1074 = vld [vmem:[%s1042 + $0x78] sm:$0xff]
                  %1075 = vst [vmem:[%s1043 + $0x78] sm:$0xff] %v1074
                  %v1076 = vld [vmem:[%s1042 + $0x80] sm:$0xff]
                  %1077 = vst [vmem:[%s1043 + $0x80] sm:$0xff] %v1076
                  %v1078 = vld [vmem:[%s1042 + $0x88] sm:$0xff]
                  %1079 = vst [vmem:[%s1043 + $0x88] sm:$0xff] %v1078
                  %v1080 = vld [vmem:[%s1042 + $0x90] sm:$0xff]
                  %1081 = vst [vmem:[%s1043 + $0x90] sm:$0xff] %v1080
                  %v1082 = vld [vmem:[%s1042 + $0x98] sm:$0xff]
                  %1083 = vst [vmem:[%s1043 + $0x98] sm:$0xff] %v1082
                  %v1084 = vld [vmem:[%s1042 + $0xa0] sm:$0xff]
                  %1085 = vst [vmem:[%s1043 + $0xa0] sm:$0xff] %v1084
                  %v1086 = vld [vmem:[%s1042 + $0xa8] sm:$0xff]
                  %1087 = vst [vmem:[%s1043 + $0xa8] sm:$0xff] %v1086
                  %v1088 = vld [vmem:[%s1042 + $0xb0] sm:$0xff]
                  %1089 = vst [vmem:[%s1043 + $0xb0] sm:$0xff] %v1088
                  %v1090 = vld [vmem:[%s1042 + $0xb8] sm:$0xff]
                  %1091 = vst [vmem:[%s1043 + $0xb8] sm:$0xff] %v1090
                  %v1092 = vld [vmem:[%s1042 + $0xc0] sm:$0xff]
                  %1093 = vst [vmem:[%s1043 + $0xc0] sm:$0xff] %v1092
                  %v1094 = vld [vmem:[%s1042 + $0xc8] sm:$0xff]
                  %1095 = vst [vmem:[%s1043 + $0xc8] sm:$0xff] %v1094
                  %v1096 = vld [vmem:[%s1042 + $0xd0] sm:$0xff]
                  %1097 = vst [vmem:[%s1043 + $0xd0] sm:$0xff] %v1096
                  %v1098 = vld [vmem:[%s1042 + $0xd8] sm:$0xff]
                  %1099 = vst [vmem:[%s1043 + $0xd8] sm:$0xff] %v1098
                  %s1100 = sadd.s32 1, %s1041
                  %p1101 = scmp.ge.s32.totalorder %s1100, %s1033
                  %s1102 = scalar_select %p1101, 0, %s1100
                  %s1103 = smul.u32 %s1102, 224
                  %s1104 = smul.u32 %s1102, 224
                  %s1105 = scalar_lea.vmem %s911, %s1103 [#allocation2]
                  %s1106 = scalar_lea.vmem %s922, %s1104
                $region67: #{tpu_custom_call.1} parent=61 // loop_footer
                  %s1038 = sadd.s32 %s1036, 1
                $region68: #{tpu_custom_call.1} parent=61 // loop_footer_branch
                  %1035 = sbr.rel target = $region64
                $region69: #{tpu_custom_call.1} parent=61 // loop_exit
                  _
                %s1107 = sdiv.u32.pop %s918, 28
                %s1108 = srem.u32.pop %s918, 28
                %s1109 = smul.u32 %s1107, 28
                %s1110 = smul.u32 8, %s1109
                %s1111 = scalar_lea.vmem %s911, %s1110 [#allocation2]
                %s1112 = smul.u32 8, %s1109
                %s1113 = scalar_lea.vmem %s922, %s1112
                // While loop
                $region70: #{tpu_custom_call.1} parent=61 // loop_pre_header
                  _
                $region71: #{tpu_custom_call.1} parent=61 // loop_header
                  %s1115 = sphi 0, %s1117
                  %p1116 = scmp.ge.s32.totalorder %s1115, %s1108
                  %s1120 = sphi 0, %s1127
                  %s1121 = sphi %s1111, %s1130
                  %s1122 = sphi %s1113, %s1131
                $region72: #{tpu_custom_call.1} parent=61 // loop_header_branch
                  %1119 = sbr.rel (%p1116) target = $region76
                $region73: #{tpu_custom_call.1} parent=61 // loop_body
                  %v1123 = vld [vmem:[%s1121] sm:$0xff]
                  %1124 = vst [vmem:[%s1122] sm:$0xff] %v1123
                  %s1125 = sadd.s32 1, %s1120
                  %p1126 = scmp.ge.s32.totalorder %s1125, %s1108
                  %s1127 = scalar_select %p1126, 0, %s1125
                  %s1128 = smul.u32 %s1127, 8
                  %s1129 = smul.u32 %s1127, 8
                  %s1130 = scalar_lea.vmem %s1111, %s1128 [#allocation2]
                  %s1131 = scalar_lea.vmem %s1113, %s1129
                $region74: #{tpu_custom_call.1} parent=61 // loop_footer
                  %s1117 = sadd.s32 %s1115, 1
                $region75: #{tpu_custom_call.1} parent=61 // loop_footer_branch
                  %1114 = sbr.rel target = $region71
                $region76: #{tpu_custom_call.1} parent=61 // loop_exit
                  _
              $region62: #{tpu_custom_call.1} parent=39 // pred_fallthru
                _
              // Predicated region
              $region77: #{tpu_custom_call.1} parent=39 // pred_check
                _
              $region78: #{tpu_custom_call.1} parent=39 // pred_check_branch
                %1133 = sbr.rel target = $region80
              $region79: #{tpu_custom_call.1} parent=39 // pred_region
                _
              $region80: #{tpu_custom_call.1} parent=39 // pred_fallthru
                _
            $region40: #{tpu_custom_call.1} parent=35 // pred_fallthru
              _
            // Predicated region
            $region41: #{tpu_custom_call.1} parent=35 // pred_check
              _
            $region42: #{tpu_custom_call.1} parent=35 // pred_check_branch
              %929 = sbr.rel target = $region44
            $region43: #{tpu_custom_call.1} parent=35 // pred_region
              %s931 = ssub.s32 256, 1
              %s932 = sdiv.u32.pop %s918, 28
              %s933 = srem.u32.pop %s918, 28
              // While loop
              $region45: #{tpu_custom_call.1} parent=43 // loop_pre_header
                _
              $region46: #{tpu_custom_call.1} parent=43 // loop_header
                %s935 = sphi 0, %s937
                %p936 = scmp.ge.s32.totalorder %s935, %s932
                %s940 = sphi 0, %s1001
                %s941 = sphi %s911, %s1004
                %s942 = sphi %s922, %s1005
              $region47: #{tpu_custom_call.1} parent=43 // loop_header_branch
                %939 = sbr.rel (%p936) target = $region51
              $region48: #{tpu_custom_call.1} parent=43 // loop_body
                %v943 = vld [vmem:[%s941] sm:%s931]
                %944 = vst [vmem:[%s942] sm:%s931] %v943
                %v945 = vld [vmem:[%s941 + $0x8] sm:%s931]
                %946 = vst [vmem:[%s942 + $0x8] sm:%s931] %v945
                %v947 = vld [vmem:[%s941 + $0x10] sm:%s931]
                %948 = vst [vmem:[%s942 + $0x10] sm:%s931] %v947
                %v949 = vld [vmem:[%s941 + $0x18] sm:%s931]
                %950 = vst [vmem:[%s942 + $0x18] sm:%s931] %v949
                %v951 = vld [vmem:[%s941 + $0x20] sm:%s931]
                %952 = vst [vmem:[%s942 + $0x20] sm:%s931] %v951
                %v953 = vld [vmem:[%s941 + $0x28] sm:%s931]
                %954 = vst [vmem:[%s942 + $0x28] sm:%s931] %v953
                %v955 = vld [vmem:[%s941 + $0x30] sm:%s931]
                %956 = vst [vmem:[%s942 + $0x30] sm:%s931] %v955
                %v957 = vld [vmem:[%s941 + $0x38] sm:%s931]
                %958 = vst [vmem:[%s942 + $0x38] sm:%s931] %v957
                %v959 = vld [vmem:[%s941 + $0x40] sm:%s931]
                %960 = vst [vmem:[%s942 + $0x40] sm:%s931] %v959
                %v961 = vld [vmem:[%s941 + $0x48] sm:%s931]
                %962 = vst [vmem:[%s942 + $0x48] sm:%s931] %v961
                %v963 = vld [vmem:[%s941 + $0x50] sm:%s931]
                %964 = vst [vmem:[%s942 + $0x50] sm:%s931] %v963
                %v965 = vld [vmem:[%s941 + $0x58] sm:%s931]
                %966 = vst [vmem:[%s942 + $0x58] sm:%s931] %v965
                %v967 = vld [vmem:[%s941 + $0x60] sm:%s931]
                %968 = vst [vmem:[%s942 + $0x60] sm:%s931] %v967
                %v969 = vld [vmem:[%s941 + $0x68] sm:%s931]
                %970 = vst [vmem:[%s942 + $0x68] sm:%s931] %v969
                %v971 = vld [vmem:[%s941 + $0x70] sm:%s931]
                %972 = vst [vmem:[%s942 + $0x70] sm:%s931] %v971
                %v973 = vld [vmem:[%s941 + $0x78] sm:%s931]
                %974 = vst [vmem:[%s942 + $0x78] sm:%s931] %v973
                %v975 = vld [vmem:[%s941 + $0x80] sm:%s931]
                %976 = vst [vmem:[%s942 + $0x80] sm:%s931] %v975
                %v977 = vld [vmem:[%s941 + $0x88] sm:%s931]
                %978 = vst [vmem:[%s942 + $0x88] sm:%s931] %v977
                %v979 = vld [vmem:[%s941 + $0x90] sm:%s931]
                %980 = vst [vmem:[%s942 + $0x90] sm:%s931] %v979
                %v981 = vld [vmem:[%s941 + $0x98] sm:%s931]
                %982 = vst [vmem:[%s942 + $0x98] sm:%s931] %v981
                %v983 = vld [vmem:[%s941 + $0xa0] sm:%s931]
                %984 = vst [vmem:[%s942 + $0xa0] sm:%s931] %v983
                %v985 = vld [vmem:[%s941 + $0xa8] sm:%s931]
                %986 = vst [vmem:[%s942 + $0xa8] sm:%s931] %v985
                %v987 = vld [vmem:[%s941 + $0xb0] sm:%s931]
                %988 = vst [vmem:[%s942 + $0xb0] sm:%s931] %v987
                %v989 = vld [vmem:[%s941 + $0xb8] sm:%s931]
                %990 = vst [vmem:[%s942 + $0xb8] sm:%s931] %v989
                %v991 = vld [vmem:[%s941 + $0xc0] sm:%s931]
                %992 = vst [vmem:[%s942 + $0xc0] sm:%s931] %v991
                %v993 = vld [vmem:[%s941 + $0xc8] sm:%s931]
                %994 = vst [vmem:[%s942 + $0xc8] sm:%s931] %v993
                %v995 = vld [vmem:[%s941 + $0xd0] sm:%s931]
                %996 = vst [vmem:[%s942 + $0xd0] sm:%s931] %v995
                %v997 = vld [vmem:[%s941 + $0xd8] sm:%s931]
                %998 = vst [vmem:[%s942 + $0xd8] sm:%s931] %v997
                %s999 = sadd.s32 1, %s940
                %p1000 = scmp.ge.s32.totalorder %s999, %s932
                %s1001 = scalar_select %p1000, 0, %s999
                %s1002 = smul.u32 %s1001, 224
                %s1003 = smul.u32 %s1001, 224
                %s1004 = scalar_lea.vmem %s911, %s1002 [#allocation2]
                %s1005 = scalar_lea.vmem %s922, %s1003
              $region49: #{tpu_custom_call.1} parent=43 // loop_footer
                %s937 = sadd.s32 %s935, 1
              $region50: #{tpu_custom_call.1} parent=43 // loop_footer_branch
                %934 = sbr.rel target = $region46
              $region51: #{tpu_custom_call.1} parent=43 // loop_exit
                _
              %s1006 = sdiv.u32.pop %s918, 28
              %s1007 = srem.u32.pop %s918, 28
              %s1008 = smul.u32 %s1006, 28
              %s1009 = smul.u32 8, %s1008
              %s1010 = scalar_lea.vmem %s911, %s1009 [#allocation2]
              %s1011 = smul.u32 8, %s1008
              %s1012 = scalar_lea.vmem %s922, %s1011
              // While loop
              $region52: #{tpu_custom_call.1} parent=43 // loop_pre_header
                _
              $region53: #{tpu_custom_call.1} parent=43 // loop_header
                %s1014 = sphi 0, %s1016
                %p1015 = scmp.ge.s32.totalorder %s1014, %s1007
                %s1019 = sphi 0, %s1026
                %s1020 = sphi %s1010, %s1029
                %s1021 = sphi %s1012, %s1030
              $region54: #{tpu_custom_call.1} parent=43 // loop_header_branch
                %1018 = sbr.rel (%p1015) target = $region58
              $region55: #{tpu_custom_call.1} parent=43 // loop_body
                %v1022 = vld [vmem:[%s1020] sm:%s931]
                %1023 = vst [vmem:[%s1021] sm:%s931] %v1022
                %s1024 = sadd.s32 1, %s1019
                %p1025 = scmp.ge.s32.totalorder %s1024, %s1007
                %s1026 = scalar_select %p1025, 0, %s1024
                %s1027 = smul.u32 %s1026, 8
                %s1028 = smul.u32 %s1026, 8
                %s1029 = scalar_lea.vmem %s1010, %s1027 [#allocation2]
                %s1030 = scalar_lea.vmem %s1012, %s1028
              $region56: #{tpu_custom_call.1} parent=43 // loop_footer
                %s1016 = sadd.s32 %s1014, 1
              $region57: #{tpu_custom_call.1} parent=43 // loop_footer_branch
                %1013 = sbr.rel target = $region53
              $region58: #{tpu_custom_call.1} parent=43 // loop_exit
                _
            $region44: #{tpu_custom_call.1} parent=35 // pred_fallthru
              _
          $region36: #{tpu_custom_call.1} parent=31 // pred_fallthru
            _
          %1134 = vnop
        $region32: #{tpu_custom_call.1} parent=27 // pred_fallthru
          _
      $region28: #{tpu_custom_call.1} parent=5 // pred_fallthru
        _
      %p1135 = scmp.le.s32.totalorder 2, %s8
      // Predicated region
      $region81: #{tpu_custom_call.1} parent=5 // pred_check
        %p1136 = pneg %p1135
      $region82: #{tpu_custom_call.1} parent=5 // pred_check_branch
        %1138 = sbr.rel (%p1136) target = $region84
      $region83: #{tpu_custom_call.1} parent=5 // pred_region
        %s1139 = ssub.s32 %s8, 2
        // Predicated region
        $region85: #{tpu_custom_call.1} parent=83 // pred_check
          %p1140 = pneg %p89
        $region86: #{tpu_custom_call.1} parent=83 // pred_check_branch
          %1142 = sbr.rel (%p1140) target = $region88
        $region87: #{tpu_custom_call.1} parent=83 // pred_region
          %s1143 = sand.u32 %s74, 1
          %s1144 = sand.u32 %s74, 1
          %s1145 = smul.addr %s1144, 224
          %s1146 = scalar_lea.vmem [#allocation2], %s1145
        $region88: #{tpu_custom_call.1} parent=83 // pred_fallthru
          _
      $region84: #{tpu_custom_call.1} parent=5 // pred_fallthru
        _
    $region6: #{tpu_custom_call.1} parent=1 // loop_footer
      %s12 = sadd.s32 1, %s8
    $region7: #{tpu_custom_call.1} parent=1 // loop_footer_branch
      %7 = sbr.rel target = $region3
    $region8: #{tpu_custom_call.1} parent=1 // loop_exit
      _

</llo_original>
